<compile_context>
chip_gen: v6e
topology: v6e:2x2x1
jax: 0.10.0
libtpu: 0.0.40
codegen_flags: <defaults>
</compile_context>

<pallas_src>
import math
import functools

import jax
import jax.numpy as jnp
from jax.experimental import pallas as pl
from jax.experimental.pallas import tpu as pltpu


# Rows of the stacked parameter array.
_MU, _NOISE, _CANCELOUT, _DOTPRODUCT = 0, 1, 2, 3


def _round_up(a, b):
    return (a + b - 1) // b * b


def _round_down(a, b):
    return a // b * b


def _feature_selector_kernel(x_ref, p_ref, o_ref, *,
                             sigma, training, soft_sigmoid,
                             use_cancelout, use_dotproduct):
    # p_ref: (4, TD) stacked per-feature params [mu, noise, cancelout_w, dp_w],
    # always f32.  All gate math stays on this (1, TD) row; the big (TB, TD)
    # tile is only touched by one native-dtype multiply.
    p = p_ref[...]

    mu = p[_MU:_MU + 1, :]                                   # (1, TD)
    if training:
        z = mu + float(sigma) * p[_NOISE:_NOISE + 1, :]
    else:
        z = mu                                               # noise * 0 at trace time

    if soft_sigmoid:
        gate = jax.nn.sigmoid(z)
    else:
        gate = jnp.clip(z + 0.5, 0.0, 1.0)                   # hard_sigmoid

    # Fold every per-feature factor into the (1, TD) gate before touching x.
    if use_cancelout:
        gate = gate * jax.nn.sigmoid(p[_CANCELOUT:_CANCELOUT + 1, :])
    if use_dotproduct:
        gate = gate * p[_DOTPRODUCT:_DOTPRODUCT + 1, :]

    # Cast the tiny gate row down once; keep the streamed multiply packed in
    # x's dtype so the kernel stays purely HBM-bandwidth bound.
    o_ref[...] = x_ref[...] * gate.astype(o_ref.dtype)


def _choose_tiles(B, D, itemsize):
    """Pick (TB, TD) for an HBM-bandwidth-bound streaming multiply.

    * TD = D (full rows, contiguous DMAs, single grid axis) whenever at least
      one sublane-aligned row group of that width fits the per-block budget;
      otherwise TD is a lane-aligned (multiple of 128) slice of D.
    * TB is aligned to the packed-sublane height for x's dtype (8 rows for
      f32, 16 for bf16, 32 for int8) so loads/stores stay unmasked.
    """
    lane = 128
    sub = max(8, 32 // max(1, itemsize))
    target_bytes = 4 * 1024 * 1024           # per x block; in+out double-buffered
                                             # stays well under the 32 MiB limit.

    rows_fit = target_bytes // max(1, D * itemsize)
    if rows_fit >= sub:
        TD = D                                # full feature dim
        TB = min(_round_down(rows_fit, sub), _round_up(B, sub))
        TB = max(TB, sub)
    else:
        TB = sub
        TD = _round_down(target_bytes // (sub * itemsize), lane)
        TD = max(lane, min(TD, _round_up(D, lane)))

    # Give the two v7x TensorCores something to do if the whole problem would
    # otherwise be a single grid step (costs ~0.35 us on single-TC chips, and
    # only for problems that already fit in one block).
    if pl.cdiv(B, TB) * pl.cdiv(D, TD) == 1 and B >= 2 * sub:
        TB = max(sub, _round_down(_round_up(B, sub) // 2, sub))
    return TB, TD


def feature_selector_forward(x, mu, noise, cancelout_w, dotproduct_w, *,
                             sigma, training=True, soft_sigmoid=False,
                             use_cancelout=False, use_dotproduct=False):
    """x: [B, D]. Per-feature params: [D]. Returns [B, D] (same dtype as x).

    Note: the output keeps x's dtype (the gate is computed in f32 and cast
    down once), so for bf16 inputs the result is bf16 rather than f32.
    """
    B, D = x.shape

    # Stack the 4 per-feature parameter rows into one (4, D) f32 array so a
    # single BlockSpec / VMEM slab carries all of them.
    params = jnp.stack(
        [mu, noise, cancelout_w, dotproduct_w], axis=0).astype(jnp.float32)

    itemsize = jnp.dtype(x.dtype).itemsize
    TB, TD = _choose_tiles(B, D, itemsize)

    grid_d = pl.cdiv(D, TD)
    grid_b = pl.cdiv(B, TB)

    # x is never padded or sliced on the host (that would up to triple the HBM
    # traffic of this 1-read/1-write kernel).  Only pad the tiny param slab
    # when the feature axis is tiled with a ragged last block.
    if grid_d > 1 and D % TD != 0:
        params = jnp.pad(params, ((0, 0), (0, grid_d * TD - D)))

    kernel = functools.partial(
        _feature_selector_kernel,
        sigma=float(sigma),
        training=bool(training),
        soft_sigmoid=bool(soft_sigmoid),
        use_cancelout=bool(use_cancelout),
        use_dotproduct=bool(use_dotproduct),
    )

    out = pl.pallas_call(
        kernel,
        out_shape=jax.ShapeDtypeStruct((B, D), x.dtype),
        # Feature axis outer: the params block index (0, j) only changes on the
        # outer axis, so its DMA is skipped across the inner batch sweep.
        grid=(grid_d, grid_b),
        in_specs=[
            pl.BlockSpec((TB, TD), lambda j, i: (i, j)),   # x tile
            pl.BlockSpec((4, TD), lambda j, i: (0, j)),    # stacked params
        ],
        out_specs=pl.BlockSpec((TB, TD), lambda j, i: (i, j)),
        compiler_params=pltpu.CompilerParams(
            dimension_semantics=("parallel", "parallel"),
            vmem_limit_bytes=32 * 1024 * 1024,
        ),
    )(x, params)
    return out


def feature_selector_reference(x, mu, noise, cancelout_w, dotproduct_w, *,
                               sigma, training=True, soft_sigmoid=False,
                               use_cancelout=False, use_dotproduct=False):
    z = mu + sigma * noise * float(training)
    if soft_sigmoid:
        gate = jax.nn.sigmoid(z)
    else:
        gate = jnp.clip(z + 0.5, 0.0, 1.0)
    out = x * gate
    if use_cancelout:
        out = out * jax.nn.sigmoid(cancelout_w)
    if use_dotproduct:
        out = out * dotproduct_w
    return out


if __name__ == "__main__":
    key = jax.random.PRNGKey(0)
    k_x, k_mu, k_noise, k_dp = jax.random.split(key, 4)

    batch, input_dim = 8, 32
    sigma = 0.5

    x = jax.random.normal(k_x, (batch, input_dim), dtype=jnp.float32)

    # Parameters initialized as the PyTorch __init__ implies:
    #   mu    = 0.01 * randn(input_dim)
    #   noise = randn(input_dim)         (one pre-sampled noise.normal_() draw)
    #   CancelOut.weights = zeros(input_dim) + 4
    #   DotProduct.weight ~ U(-1/sqrt(D), 1/sqrt(D))
    mu = 0.01 * jax.random.normal(k_mu, (input_dim,), dtype=jnp.float32)
    noise = jax.random.normal(k_noise, (input_dim,), dtype=jnp.float32)
    cancelout_w = jnp.zeros((input_dim,), dtype=jnp.float32) + 4.0
    stdv = 1.0 / math.sqrt(input_dim)
    dotproduct_w = jax.random.uniform(
        k_dp, (input_dim,), dtype=jnp.float32, minval=-stdv, maxval=stdv)

    flags = dict(sigma=sigma, training=True, soft_sigmoid=False,
                 use_cancelout=True, use_dotproduct=True)

    out = feature_selector_forward(x, mu, noise, cancelout_w, dotproduct_w, **flags)
    out = jax.block_until_ready(out)

    ref = feature_selector_reference(x, mu, noise, cancelout_w, dotproduct_w, **flags)

    assert out.shape == (batch, input_dim)
    assert out.dtype == jnp.float32
    assert jnp.allclose(out, ref, atol=1e-6, rtol=1e-6), "mismatch vs reference"

    print("KERNEL_OK")
</pallas_src>

<mosaic_0001>
module attributes {stable_mosaic.version = 11 : i64} {
  func.func @_feature_selector_kernel(%arg0: i32, %arg1: i32, %arg2: memref<8x32xf32, #tpu.memory_space<vmem>>, %arg3: memref<4x32xf32, #tpu.memory_space<vmem>>, %arg4: memref<8x32xf32, #tpu.memory_space<vmem>>) attributes {dimension_semantics = [#tpu.dimension_semantics<parallel>, #tpu.dimension_semantics<parallel>], iteration_bounds = array<i64: 1, 1>, scalar_prefetch = 0 : i64, scratch_operands = 0 : i64, tpu.core_type = #tpu.core_type<tc>, window_params = [{transform_indices = @transform_0, window_bounds = array<i64: 8, 32>}, {transform_indices = @transform_1, window_bounds = array<i64: 4, 32>}, {transform_indices = @transform_2, window_bounds = array<i64: 8, 32>}]} {
    %c0 = arith.constant 0 : index
    %c0_0 = arith.constant 0 : index
    %0 = vector.load %arg3[%c0, %c0_0] : memref<4x32xf32, #tpu.memory_space<vmem>>, vector<4x32xf32>
    %1 = vector.extract_strided_slice %0 {offsets = [0, 0], sizes = [1, 32], strides = [1, 1]} : vector<4x32xf32> to vector<1x32xf32>
    %2 = vector.extract_strided_slice %0 {offsets = [1, 0], sizes = [1, 32], strides = [1, 1]} : vector<4x32xf32> to vector<1x32xf32>
    %cst = arith.constant 5.000000e-01 : f32
    %3 = vector.broadcast %cst : f32 to vector<1x32xf32>
    %4 = arith.mulf %3, %2 : vector<1x32xf32>
    %5 = arith.addf %1, %4 : vector<1x32xf32>
    %cst_1 = arith.constant 5.000000e-01 : f32
    %6 = vector.broadcast %cst_1 : f32 to vector<1x32xf32>
    %7 = arith.addf %5, %6 : vector<1x32xf32>
    %cst_2 = arith.constant 0.000000e+00 : f32
    %cst_3 = arith.constant 1.000000e+00 : f32
    %8 = vector.broadcast %cst_2 : f32 to vector<1x32xf32>
    %9 = arith.maximumf %8, %7 : vector<1x32xf32>
    %10 = vector.broadcast %cst_3 : f32 to vector<1x32xf32>
    %11 = arith.minimumf %10, %9 : vector<1x32xf32>
    %12 = vector.extract_strided_slice %0 {offsets = [2, 0], sizes = [1, 32], strides = [1, 1]} : vector<4x32xf32> to vector<1x32xf32>
    %13 = arith.negf %12 : vector<1x32xf32>
    %14 = math.exp %13 : vector<1x32xf32>
    %cst_4 = arith.constant 1.000000e+00 : f32
    %15 = vector.broadcast %cst_4 : f32 to vector<1x32xf32>
    %16 = arith.addf %15, %14 : vector<1x32xf32>
    %17 = arith.divf %15, %16 : vector<1x32xf32>
    %18 = arith.mulf %11, %17 : vector<1x32xf32>
    %19 = vector.extract_strided_slice %0 {offsets = [3, 0], sizes = [1, 32], strides = [1, 1]} : vector<4x32xf32> to vector<1x32xf32>
    %20 = arith.mulf %18, %19 : vector<1x32xf32>
    %c0_5 = arith.constant 0 : index
    %c0_6 = arith.constant 0 : index
    %21 = vector.load %arg2[%c0_5, %c0_6] : memref<8x32xf32, #tpu.memory_space<vmem>>, vector<8x32xf32>
    %22 = vector.broadcast %20 : vector<1x32xf32> to vector<8x32xf32>
    %23 = arith.mulf %21, %22 : vector<8x32xf32>
    %c0_7 = arith.constant 0 : index
    %c0_8 = arith.constant 0 : index
    %24 = vector.load %arg4[%c0_7, %c0_8] : memref<8x32xf32, #tpu.memory_space<vmem>>, vector<8x32xf32>
    tpu.vector_store %arg4[%c0_7, %c0_8], %23 {strides = array<i32>} : memref<8x32xf32, #tpu.memory_space<vmem>>, vector<8x32xf32>,
    return
  }
  func.func @transform_0(%arg0: i32, %arg1: i32) -> (i32, i32) {
    %c0_i32 = arith.constant 0 : i32
    return %arg1, %arg0 : i32, i32
  }
  func.func @transform_1(%arg0: i32, %arg1: i32) -> (i32, i32) {
    %c0_i32 = arith.constant 0 : i32
    %c0_i32_0 = arith.constant 0 : i32
    return %c0_i32, %arg0 : i32, i32
  }
  func.func @transform_2(%arg0: i32, %arg1: i32) -> (i32, i32) {
    %c0_i32 = arith.constant 0 : i32
    return %arg1, %arg0 : i32, i32
  }
}

</mosaic_0001>

<llo_original>
// kernel: tpu_custom_call.1
$region0: #{tpu_custom_call.1}
  #allocation0 [shape = 'u32[]', space=smem, size = 0x4, offset = 0x4, fixed_abs, tag = 'smem constant byte address 0x4 - core index']
  #allocation1 [shape = 'u32[144,128]{1,0:T(1,128)}', space=vmem, size = 0x12000, scoped, tag = 'internal scratch']
  %s0 = inlined_call_operand.hbm [shape: f32[8,32], index: 0, kind: input, shape index: {}]
  %s1 = inlined_call_operand.hbm [shape: f32[4,32], index: 1, kind: input, shape index: {}]
  %s2 = inlined_call_operand.hbm [shape: f32[8,32], index: 2, kind: output, shape index: {}]
  %s3 = sld [smem:[#allocation0]]
  $region26: #{tpu_custom_call.1} parent=0
    _
  %s5 = ssub.s32 1, %s3
  %s6 = scalar_select 0, %s5, %s3
  $region1: #{tpu_custom_call.1} parent=0
    #allocation2 [shape = 'u8[4096]{0}', space=vmem, size = 0x1000, scoped, tag = 'input window, operand 0, single buffered']
    #allocation3 [shape = 's32[1]{0}', space=sflag, size = 0x4, scoped, tag = 'scoped memory for tpu_custom_call.1']
    #allocation4 [shape = 's32[1]{0}', space=sflag, size = 0x4, scoped, tag = 'scoped memory for tpu_custom_call.1']
    #allocation5 [shape = 'u8[2048]{0}', space=vmem, size = 0x800, scoped, tag = 'input window, operand 1, single buffered']
    #allocation6 [shape = 's32[1]{0}', space=sflag, size = 0x4, scoped, tag = 'scoped memory for tpu_custom_call.1']
    #allocation7 [shape = 'u8[4096]{0}', space=vmem, size = 0x1000, scoped, tag = 'output window, operand 0, single buffered']
    %7 = vsyncpa [#allocation3], 0
    %8 = vsyncpa [#allocation6], 0
    %9 = vsyncpa [#allocation4], 0
    // Predicated region
    $region2: #{tpu_custom_call.1} parent=1 // pred_check
      _
    $region3: #{tpu_custom_call.1} parent=1 // pred_check_branch
      %11 = sbr.rel (0) target = $region5
    $region4: #{tpu_custom_call.1} parent=1 // pred_region
      %s13 = ssub.s32 128, 128
      %14 = vsyncadd [#allocation3], %s13
      %s16 = sshll.u32 [#allocation2], 4
      %s17 = int_to_ptr.vmem [resolvable:$true] %s16
      %19 = dma.hbm_to_vmem [thread:$0]  %s0, 128, %s17, [#allocation3]
    $region5: #{tpu_custom_call.1} parent=1 // pred_fallthru
      _
    // Predicated region
    $region6: #{tpu_custom_call.1} parent=1 // pred_check
      _
    $region7: #{tpu_custom_call.1} parent=1 // pred_check_branch
      %21 = sbr.rel (0) target = $region9
    $region8: #{tpu_custom_call.1} parent=1 // pred_region
      %s23 = ssub.s32 64, 64
      %24 = vsyncadd [#allocation6], %s23
      %s26 = sshll.u32 [#allocation5], 4
      %s27 = int_to_ptr.vmem [resolvable:$true] %s26
      %29 = dma.hbm_to_vmem [thread:$0]  %s1, 64, %s27, [#allocation6]
    $region9: #{tpu_custom_call.1} parent=1 // pred_fallthru
      _
    // Predicated region
    $region10: #{tpu_custom_call.1} parent=1 // pred_check
      _
    $region11: #{tpu_custom_call.1} parent=1 // pred_check_branch
      %31 = sbr.rel (0) target = $region13
    $region12: #{tpu_custom_call.1} parent=1 // pred_region
      %32 = dma.done [#allocation3], 128
    $region13: #{tpu_custom_call.1} parent=1 // pred_fallthru
      _
    // Predicated region
    $region14: #{tpu_custom_call.1} parent=1 // pred_check
      _
    $region15: #{tpu_custom_call.1} parent=1 // pred_check_branch
      %34 = sbr.rel (0) target = $region17
    $region16: #{tpu_custom_call.1} parent=1 // pred_region
      %35 = dma.done [#allocation6], 64
    $region17: #{tpu_custom_call.1} parent=1 // pred_fallthru
      _
    %v36 = vld [vmem:[#allocation5] sm:$0xf]
    %v37 = vmul.f32 %v36, 0.5
    %v39 = vrot.slane %v37, 1
    %v41 = vadd.f32 %v36, %v39
    %v42 = vadd.f32 %v41, 0.5
    %v43 = vmax.f32 %v42, 0.0
    %v44 = vmin.f32 %v43, 1.0
    %v45 = vxor.u32 %v36, 2147483648
    %v46 = vmul.f32 %v45, 1.442695
    %v47 = vpow.pop %v46
    %v48 = vadd.f32 %v47, 1.0
    %v49 = vrcp.pop %v48
    %v50 = vmul.f32 1.0, %v49
    %v52 = vrot.slane %v50, 2
    %v54 = vmul.f32 %v44, %v52
    %v56 = vrot.slane %v36, 3
    %v58 = vmul.f32 %v54, %v56
    %v59 = vld [vmem:[#allocation2] sm:$0xff]
    %v60 = vlaneseq
    %v61 = vshrl.u32 %v60, 7
    %v62 = vsub.s32 0, %v61
    %v63 = vrot.slane %v58, %v62
    %v64 = vmul.f32 %v59, %v63
    %vm65 = vcmask 261120
    %66 = vst.msk [vmem:[#allocation7] sm:$0xff] %vm65, %v64
    // Predicated region
    $region18: #{tpu_custom_call.1} parent=1 // pred_check
      _
    $region19: #{tpu_custom_call.1} parent=1 // pred_check_branch
      %68 = sbr.rel (0) target = $region21
    $region20: #{tpu_custom_call.1} parent=1 // pred_region
      %s70 = ssub.s32 128, 128
      %71 = vsyncadd [#allocation4], %s70
      %s73 = sshll.u32 [#allocation7], 4
      %s74 = int_to_ptr.vmem [resolvable:$true] %s73
      %76 = dma.vmem_to_hbm [thread:$0]  %s74, 128, %s2, [#allocation4]
    $region21: #{tpu_custom_call.1} parent=1 // pred_fallthru
      _
    // Predicated region
    $region22: #{tpu_custom_call.1} parent=1 // pred_check
      _
    $region23: #{tpu_custom_call.1} parent=1 // pred_check_branch
      %78 = sbr.rel (0) target = $region25
    $region24: #{tpu_custom_call.1} parent=1 // pred_region
      %79 = dma.done [#allocation4], 128
    $region25: #{tpu_custom_call.1} parent=1 // pred_fallthru
      _
    %80 = vsyncpa [#allocation3], 1
    %81 = vsyncpa [#allocation6], 1
    %82 = vsyncpa [#allocation4], 1

</llo_original>
